<compile_context>
chip_gen: v7x
topology: tpu7x:2x2x1
jax: 0.10.0
libtpu: 0.0.40
codegen_flags: <defaults>
</compile_context>

<pallas_src>
import functools

import jax
import jax.numpy as jnp
from jax.experimental import pallas as pl
from jax.experimental.pallas import tpu as pltpu

NUM_EXPERTS = 8
TOP_K = 2
HIDDEN = 128
INTER = 128
LANES = 128


# ----------------------------- Pallas kernels ------------------------------------


def _router_kernel(x_ref, w_ref, logits_ref, xbf_ref, xnorm_ref):
    # router_logits = hidden_states @ W_gate (weight lane-padded to a multiple of 128
    # so the logits stores are full-lane / unmasked). Also emit the bf16 cast of x and
    # per-token ||x|| so the f32 activations are only read from HBM once.
    x = x_ref[...]                                                       # (TT, H) f32
    logits_ref[...] = jnp.dot(x, w_ref[...], preferred_element_type=jnp.float32)
    xbf_ref[...] = x.astype(jnp.bfloat16)
    xnorm_ref[...] = jnp.sqrt(jnp.sum(x * x, axis=1, keepdims=True))     # (TT, 1)


def _moe_kernel(counts_ref, x_ref, we_ref, me_ref, wgu_ref, wd_ref,
                out_ref, stats_ref):
    """Grid (token_tile, expert): SwiGLU expert MLP, weighted combine, ||y|| partials.

    counts_ref : SMEM (nt, E) int32, scalar-prefetched tokens-per-(tile, expert).
    out_ref    : (tt, H) f32, VMEM-resident accumulator across the inner e axis.
    stats_ref  : (1, 1, 1, LANES) f32, masked sum of ||y|| for this (tile, expert).
    """
    t = pl.program_id(0)
    e = pl.program_id(1)

    @pl.when(e == 0)
    def _():
        out_ref[...] = jnp.zeros_like(out_ref)

    # Default (also covers tiles where this expert receives no tokens).
    stats_ref[...] = jnp.zeros_like(stats_ref)

    @pl.when(counts_ref[t, e] > 0)
    def _():
        x = x_ref[...]                                                   # (TT, H) bf16
        # Fused gate+up projection: one MXU pass over (H, 2I); bf16 operands, f32 acc.
        gu = jnp.dot(x, wgu_ref[...], preferred_element_type=jnp.float32)  # (TT, 2I)
        inter = wd_ref.shape[0]
        g = gu[:, :inter]
        u = gu[:, inter:]
        h = g * jax.nn.sigmoid(g) * u                                    # silu(g) * u, f32
        y = jnp.dot(h.astype(jnp.bfloat16), wd_ref[...],
                    preferred_element_type=jnp.float32)                  # (TT, H) f32

        # final_hidden_states accumulated directly in the resident output block.
        out_ref[...] += we_ref[...] * y

        # importance-hook partial: masked sum of ||y|| (rest finalized in wrapper).
        y_norm = jnp.sqrt(jnp.sum(y * y, axis=1, keepdims=True))         # (TT, 1)
        sum_yn = jnp.sum(me_ref[...] * y_norm)
        stats_ref[...] = jnp.full(stats_ref.shape, sum_yn, dtype=jnp.float32)


# ----------------------------- wrapper (glue in plain JAX) -----------------------


@functools.partial(jax.jit, static_argnames=("top_k", "tt"))
def olmoe_importance_forward(x, params, top_k=TOP_K, tt=256):
    B, S, H = x.shape
    T = B * S
    E = params["router"].shape[1]
    I = params["wg"].shape[2]
    tt = min(tt, T)
    # TODO(synk): real batches need padding to a multiple of tt; padded tokens must be
    # zeroed out of mask_dense / wtk_dense or they contaminate the hook statistics.
    assert T % tt == 0 and tt % 8 == 0, (T, tt)
    nt = T // tt

    x2d = x.reshape(T, H).astype(jnp.float32)

    # ---- router matmul (Pallas): logits (lane-padded), bf16(x) and ||x|| in one pass
    e_pad = ((E + LANES - 1) // LANES) * LANES
    w_router = jnp.zeros((H, e_pad), jnp.float32).at[:, :E].set(
        params["router"].astype(jnp.float32))
    logits_pad, x_bf, x_norm = pl.pallas_call(
        _router_kernel,
        grid=(nt,),
        in_specs=[pl.BlockSpec((tt, H), lambda t: (t, 0)),
                  pl.BlockSpec((H, e_pad), lambda t: (0, 0))],
        out_specs=[pl.BlockSpec((tt, e_pad), lambda t: (t, 0)),
                   pl.BlockSpec((tt, H), lambda t: (t, 0)),
                   pl.BlockSpec((tt, 1), lambda t: (t, 0))],
        out_shape=[jax.ShapeDtypeStruct((T, e_pad), jnp.float32),
                   jax.ShapeDtypeStruct((T, H), jnp.bfloat16),
                   jax.ShapeDtypeStruct((T, 1), jnp.float32)],
        compiler_params=pltpu.CompilerParams(dimension_semantics=("parallel",)),
    )(x2d, w_router)
    router_logits = logits_pad[:, :E]

    # ---- softmax + top-k routing (control-heavy glue, kept in JAX) ------------------
    # TODO(synk): torch.topk tie-breaking order is not bit-reproduced by lax.top_k.
    probs = jax.nn.softmax(router_logits, axis=-1)
    topk_w, topk_idx = jax.lax.top_k(probs, top_k)               # (T, K)
    onehot = jax.nn.one_hot(topk_idx, E, dtype=jnp.float32)      # (T, K, E)
    wtk_dense = jnp.einsum("tk,tke->te", topk_w, onehot)         # (T, E)
    mask_dense = jnp.sum(onehot, axis=1)                         # (T, E) 0/1
    rowsum = jnp.sum(topk_w, axis=1, keepdims=True)              # (T, 1) sum of top-k w

    # Per-(tile, expert) token counts for the scalar-prefetch skip of empty experts.
    counts_te = mask_dense.reshape(nt, tt, E).sum(axis=1).astype(jnp.int32)   # (nt, E)

    # Hoisted per-expert routing columns, fed via per-expert BlockSpecs.
    w_e_all = jnp.transpose(wtk_dense)[:, :, None]               # (E, T, 1)
    m_e_all = jnp.transpose(mask_dense)[:, :, None]              # (E, T, 1)

    # Fused gate|up weights and down weights, bf16 MXU operands (f32 accumulate).
    wgu = jnp.concatenate([params["wg"], params["wu"]], axis=-1).astype(jnp.bfloat16)
    wd = params["wd"].astype(jnp.bfloat16)                       # (E, I, H)

    # Realistic VMEM budget: double-buffered inputs + resident out tile + stats,
    # clamped to [32 MiB, 48 MiB] so it is safe on v7x's 64 MiB physical VMEM.
    weight_bytes = (H * 2 * I + I * H) * 2                       # bf16 wgu + wd, 1 expert
    in_tile_bytes = tt * H * 2 + 2 * tt * LANES * 4              # x bf16 + lane-padded w/m
    vmem_est = 2 * (weight_bytes + in_tile_bytes) + tt * H * 4 + 2 * LANES * 4
    vmem_limit = int(min(max(2 * vmem_est, 32 * 1024 * 1024), 48 * 1024 * 1024))

    final2d, yn_part = pl.pallas_call(
        _moe_kernel,
        grid_spec=pltpu.PrefetchScalarGridSpec(
            num_scalar_prefetch=1,
            grid=(nt, E),
            in_specs=[
                pl.BlockSpec((tt, H), lambda t, e, c: (t, 0)),                     # x bf16
                pl.BlockSpec((pl.Squeezed(), tt, 1), lambda t, e, c: (e, t, 0)),   # w_e
                pl.BlockSpec((pl.Squeezed(), tt, 1), lambda t, e, c: (e, t, 0)),   # m_e
                pl.BlockSpec((pl.Squeezed(), H, 2 * I), lambda t, e, c: (e, 0, 0)),# gate|up
                pl.BlockSpec((pl.Squeezed(), I, H), lambda t, e, c: (e, 0, 0)),    # down
            ],
            out_specs=[
                pl.BlockSpec((tt, H), lambda t, e, c: (t, 0)),
                pl.BlockSpec((1, 1, 1, LANES), lambda t, e, c: (t, e, 0, 0)),
            ],
        ),
        out_shape=[
            jax.ShapeDtypeStruct((T, H), jnp.float32),
            jax.ShapeDtypeStruct((nt, E, 1, LANES), jnp.float32),
        ],
        compiler_params=pltpu.CompilerParams(
            dimension_semantics=("parallel", "arbitrary"),
            vmem_limit_bytes=vmem_limit),
    )(counts_te, x_bf, w_e_all, m_e_all, wgu, wd)

    # ---- finalize per-expert statistics ----------------------------------------------
    # counts / w_sum / sum_xn depend only on routing + ||x||: computed here (no kernel
    # recompute); only the masked sum of ||y|| needed the expert outputs.
    counts = jnp.sum(mask_dense, axis=0)                         # (E,)
    w_sum = jnp.sum(mask_dense * rowsum, axis=0)                 # (E,)
    sum_xn = jnp.sum(mask_dense * x_norm, axis=0)                # (E,)
    sum_yn = jnp.sum(yn_part[:, :, 0, 0], axis=0)                # (E,)
    inv = jnp.where(counts > 0, 1.0 / jnp.maximum(counts, 1.0), 0.0)
    in_l2 = sum_xn * inv                                         # mean ||x|| over tokens of e
    out_l2 = sum_yn * inv                                        # mean ||y|| over tokens of e
    importance = {
        "expert_counts": counts,
        "expert_weights_sum": w_sum,
        "expert_input_l2_sum": in_l2,
        "expert_output_l2_sum": out_l2,
        "expert_input_count": (counts > 0).astype(jnp.float32),
        "expert_contribution_sum": w_sum * out_l2,
    }
    # TODO(synk): cross-call accumulation into the wrapper's persistent Python-side
    # buffers is host-side state; we return per-call increments.
    # TODO(synk): expert_output_l2_sum / expert_contribution_sum come from bf16-operand
    # MXU matmuls (f32 accumulate); the torch reference is pure f32 (documented drift).
    return final2d.reshape(B, S, H), router_logits, importance


# ----------------------------- pure-JAX reference --------------------------------


def _reference(x, params, top_k):
    B, S, H = x.shape
    T = B * S
    E = params["router"].shape[1]
    x2d = x.reshape(T, H).astype(jnp.float32)
    logits = x2d @ params["router"]
    probs = jax.nn.softmax(logits, axis=-1)
    tw, ti = jax.lax.top_k(probs, top_k)
    final = jnp.zeros((T, H), jnp.float32)
    counts, wsum, il2, ol2, icnt, contrib = ([] for _ in range(6))
    for e in range(E):
        g = x2d @ params["wg"][e]
        u = x2d @ params["wu"][e]
        y = (jax.nn.silu(g) * u) @ params["wd"][e]
        sel = ti == e
        w_e = jnp.sum(jnp.where(sel, tw, 0.0), axis=1)
        m_e = jnp.any(sel, axis=1).astype(jnp.float32)
        final = final + w_e[:, None] * y
        n = jnp.sum(m_e)
        inv = jnp.where(n > 0, 1.0 / jnp.maximum(n, 1.0), 0.0)
        xin = jnp.sum(m_e * jnp.linalg.norm(x2d, axis=1)) * inv
        yout = jnp.sum(m_e * jnp.linalg.norm(y, axis=1)) * inv
        ws = jnp.sum(m_e * jnp.sum(tw, axis=1))
        counts.append(n)
        wsum.append(ws)
        il2.append(xin)
        ol2.append(yout)
        icnt.append((n > 0).astype(jnp.float32))
        contrib.append(ws * yout)
    stats = {
        "expert_counts": jnp.stack(counts),
        "expert_weights_sum": jnp.stack(wsum),
        "expert_input_l2_sum": jnp.stack(il2),
        "expert_output_l2_sum": jnp.stack(ol2),
        "expert_input_count": jnp.stack(icnt),
        "expert_contribution_sum": jnp.stack(contrib),
    }
    return final.reshape(B, S, H), logits, stats


# ----------------------------- main -----------------------------------------------


if __name__ == "__main__":
    key = jax.random.PRNGKey(0)
    B, S = 2, 8
    k1, k2, k3, k4, k5 = jax.random.split(key, 5)
    x = jax.random.normal(k1, (B, S, HIDDEN), jnp.float32)
    params = {
        "router": 0.05 * jax.random.normal(k2, (HIDDEN, NUM_EXPERTS), jnp.float32),
        "wg": 0.05 * jax.random.normal(k3, (NUM_EXPERTS, HIDDEN, INTER), jnp.float32),
        "wu": 0.05 * jax.random.normal(k4, (NUM_EXPERTS, HIDDEN, INTER), jnp.float32),
        "wd": 0.05 * jax.random.normal(k5, (NUM_EXPERTS, INTER, HIDDEN), jnp.float32),
    }

    # tt=8 gives nt=2 token tiles, exercising the "parallel" (megacore-splittable) axis
    # and the resident-output accumulation across the inner expert axis.
    out, logits, stats = olmoe_importance_forward(x, params, tt=8)
    jax.block_until_ready(out)
    jax.block_until_ready(logits)
    jax.block_until_ready(stats)

    ref_out, ref_logits, ref_stats = _reference(x, params, TOP_K)
    assert jnp.allclose(out, ref_out, rtol=3e-2, atol=3e-2)
    assert jnp.allclose(logits, ref_logits, rtol=3e-2, atol=3e-2)
    for name in stats:
        # Expert MLPs run with bf16 MXU operands (f32 accumulate); reference is pure f32.
        assert jnp.allclose(stats[name], ref_stats[name], rtol=5e-2, atol=5e-2), name

    print("KERNEL_OK")
</pallas_src>

<mosaic_0001>
module attributes {stable_mosaic.version = 11 : i64} {
  func.func @_router_kernel(%arg0: i32, %arg1: memref<8x128xf32, #tpu.memory_space<vmem>>, %arg2: memref<128x128xf32, #tpu.memory_space<vmem>>, %arg3: memref<8x128xf32, #tpu.memory_space<vmem>>, %arg4: memref<8x128xbf16, #tpu.memory_space<vmem>>, %arg5: memref<8x1xf32, #tpu.memory_space<vmem>>) attributes {dimension_semantics = [#tpu.dimension_semantics<parallel>], iteration_bounds = array<i64: 2>, scalar_prefetch = 0 : i64, scratch_operands = 0 : i64, tpu.core_type = #tpu.core_type<tc>, window_params = [{transform_indices = @transform_0, window_bounds = array<i64: 8, 128>}, {pipeline_mode = #tpu.pipeline_mode<synchronous>, transform_indices = @transform_1, window_bounds = array<i64: 128, 128>}, {transform_indices = @transform_2, window_bounds = array<i64: 8, 128>}, {transform_indices = @transform_3, window_bounds = array<i64: 8, 128>}, {transform_indices = @transform_4, window_bounds = array<i64: 8, 1>}]} {
    %c0 = arith.constant 0 : index
    %c0_0 = arith.constant 0 : index
    %0 = vector.load %arg1[%c0, %c0_0] : memref<8x128xf32, #tpu.memory_space<vmem>>, vector<8x128xf32>
    %c0_1 = arith.constant 0 : index
    %c0_2 = arith.constant 0 : index
    %1 = vector.load %arg2[%c0_1, %c0_2] : memref<128x128xf32, #tpu.memory_space<vmem>>, vector<128x128xf32>
    %cst = arith.constant dense<0.000000e+00> : vector<8x128xf32>
    %2 = tpu.matmul %0, %1, %cst {dimension_numbers = #tpu.dot_dimension_numbers<[1], [0], [0], [1], [0, 0, 1, 1], [], []>} : vector<8x128xf32>, vector<128x128xf32>, vector<8x128xf32> -> vector<8x128xf32>
    %c0_3 = arith.constant 0 : index
    %c0_4 = arith.constant 0 : index
    %3 = vector.load %arg3[%c0_3, %c0_4] : memref<8x128xf32, #tpu.memory_space<vmem>>, vector<8x128xf32>
    tpu.vector_store %arg3[%c0_3, %c0_4], %2 {strides = array<i32>} : memref<8x128xf32, #tpu.memory_space<vmem>>, vector<8x128xf32>,
    %4 = arith.truncf %0 : vector<8x128xf32> to vector<8x128xbf16>
    %c0_5 = arith.constant 0 : index
    %c0_6 = arith.constant 0 : index
    %5 = vector.load %arg4[%c0_5, %c0_6] : memref<8x128xbf16, #tpu.memory_space<vmem>>, vector<8x128xbf16>
    tpu.vector_store %arg4[%c0_5, %c0_6], %4 {strides = array<i32>} : memref<8x128xbf16, #tpu.memory_space<vmem>>, vector<8x128xbf16>,
    %6 = arith.mulf %0, %0 : vector<8x128xf32>
    %cst_7 = arith.constant dense<0.000000e+00> : vector<8xf32>
    %7 = vector.multi_reduction <add>, %6, %cst_7 [1] : vector<8x128xf32> to vector<8xf32>
    %8 = vector.shape_cast %7 : vector<8xf32> to vector<8x1xf32>
    %9 = math.sqrt %8 : vector<8x1xf32>
    %c0_8 = arith.constant 0 : index
    %c0_9 = arith.constant 0 : index
    %10 = vector.load %arg5[%c0_8, %c0_9] : memref<8x1xf32, #tpu.memory_space<vmem>>, vector<8x1xf32>
    tpu.vector_store %arg5[%c0_8, %c0_9], %9 {strides = array<i32>} : memref<8x1xf32, #tpu.memory_space<vmem>>, vector<8x1xf32>,
    return
  }
  func.func @transform_0(%arg0: i32) -> (i32, i32) {
    %c0_i32 = arith.constant 0 : i32
    %c0_i32_0 = arith.constant 0 : i32
    return %arg0, %c0_i32 : i32, i32
  }
  func.func @transform_1(%arg0: i32) -> (i32, i32) {
    %c0_i32 = arith.constant 0 : i32
    %c0_i32_0 = arith.constant 0 : i32
    %c0_i32_1 = arith.constant 0 : i32
    return %c0_i32, %c0_i32_0 : i32, i32
  }
  func.func @transform_2(%arg0: i32) -> (i32, i32) {
    %c0_i32 = arith.constant 0 : i32
    %c0_i32_0 = arith.constant 0 : i32
    return %arg0, %c0_i32 : i32, i32
  }
  func.func @transform_3(%arg0: i32) -> (i32, i32) {
    %c0_i32 = arith.constant 0 : i32
    %c0_i32_0 = arith.constant 0 : i32
    return %arg0, %c0_i32 : i32, i32
  }
  func.func @transform_4(%arg0: i32) -> (i32, i32) {
    %c0_i32 = arith.constant 0 : i32
    %c0_i32_0 = arith.constant 0 : i32
    return %arg0, %c0_i32 : i32, i32
  }
}

module attributes {stable_mosaic.version = 11 : i64} {
  func.func @_moe_kernel(%arg0: i32, %arg1: i32, %arg2: memref<2x8xi32, #tpu.memory_space<smem>>, %arg3: memref<8x128xbf16, #tpu.memory_space<vmem>>, %arg4: memref<1x8x1xf32, #tpu.memory_space<vmem>>, %arg5: memref<1x8x1xf32, #tpu.memory_space<vmem>>, %arg6: memref<1x128x256xbf16, #tpu.memory_space<vmem>>, %arg7: memref<1x128x128xbf16, #tpu.memory_space<vmem>>, %arg8: memref<8x128xf32, #tpu.memory_space<vmem>>, %arg9: memref<1x1x1x128xf32, #tpu.memory_space<vmem>>) attributes {dimension_semantics = [#tpu.dimension_semantics<parallel>, #tpu.dimension_semantics<arbitrary>], iteration_bounds = array<i64: 2, 8>, scalar_prefetch = 1 : i64, scratch_operands = 0 : i64, tpu.core_type = #tpu.core_type<tc>, window_params = [{transform_indices = @transform_0, window_bounds = array<i64: 8, 128>}, {transform_indices = @transform_1, window_bounds = array<i64: 1, 8, 1>}, {transform_indices = @transform_2, window_bounds = array<i64: 1, 8, 1>}, {transform_indices = @transform_3, window_bounds = array<i64: 1, 128, 256>}, {transform_indices = @transform_4, window_bounds = array<i64: 1, 128, 128>}, {transform_indices = @transform_5, window_bounds = array<i64: 8, 128>}, {transform_indices = @transform_6, window_bounds = array<i64: 1, 1, 1, 128>}]} {
    %c0_i32 = arith.constant 0 : i32
    %0 = arith.cmpi eq, %arg1, %c0_i32 : i32
    %1 = arith.extui %0 : i1 to i32
    %c0_i32_0 = arith.constant 0 : i32
    %2 = arith.cmpi ne, %1, %c0_i32_0 : i32
    scf.if %2 {
      %cst_6 = arith.constant 0.000000e+00 : f32
      %11 = vector.broadcast %cst_6 : f32 to vector<8x128xf32>
      %c0_7 = arith.constant 0 : index
      %c0_8 = arith.constant 0 : index
      %12 = vector.load %arg8[%c0_7, %c0_8] : memref<8x128xf32, #tpu.memory_space<vmem>>, vector<8x128xf32>
      tpu.vector_store %arg8[%c0_7, %c0_8], %11 {strides = array<i32>} : memref<8x128xf32, #tpu.memory_space<vmem>>, vector<8x128xf32>,
    } else {
    }
    %cst = arith.constant 0.000000e+00 : f32
    %3 = vector.broadcast %cst : f32 to vector<1x1x1x128xf32>
    %c0 = arith.constant 0 : index
    %c0_1 = arith.constant 0 : index
    %c0_2 = arith.constant 0 : index
    %c0_3 = arith.constant 0 : index
    %4 = vector.load %arg9[%c0, %c0_1, %c0_2, %c0_3] : memref<1x1x1x128xf32, #tpu.memory_space<vmem>>, vector<1x1x1x128xf32>
    tpu.vector_store %arg9[%c0, %c0_1, %c0_2, %c0_3], %3 {strides = array<i32>} : memref<1x1x1x128xf32, #tpu.memory_space<vmem>>, vector<1x1x1x128xf32>,
    %5 = arith.index_cast %arg0 : i32 to index
    %6 = arith.index_cast %arg1 : i32 to index
    %7 = memref.load %arg2[%5, %6] : memref<2x8xi32, #tpu.memory_space<smem>>
    %c0_i32_4 = arith.constant 0 : i32
    %8 = arith.cmpi sgt, %7, %c0_i32_4 : i32
    %9 = arith.extui %8 : i1 to i32
    %c0_i32_5 = arith.constant 0 : i32
    %10 = arith.cmpi ne, %9, %c0_i32_5 : i32
    scf.if %10 {
      %c0_6 = arith.constant 0 : index
      %c0_7 = arith.constant 0 : index
      %11 = vector.load %arg3[%c0_6, %c0_7] : memref<8x128xbf16, #tpu.memory_space<vmem>>, vector<8x128xbf16>
      %c0_8 = arith.constant 0 : index
      %c0_9 = arith.constant 0 : index
      %c0_10 = arith.constant 0 : index
      %12 = vector.load %arg6[%c0_8, %c0_9, %c0_10] : memref<1x128x256xbf16, #tpu.memory_space<vmem>>, vector<1x128x256xbf16>
      %13 = vector.shape_cast %12 : vector<1x128x256xbf16> to vector<128x256xbf16>
      %cst_11 = arith.constant dense<0.000000e+00> : vector<8x256xf32>
      %14 = tpu.matmul %11, %13, %cst_11 {dimension_numbers = #tpu.dot_dimension_numbers<[1], [0], [0], [1], [0, 0, 1, 1], [], []>} : vector<8x128xbf16>, vector<128x256xbf16>, vector<8x256xf32> -> vector<8x256xf32>
      %15 = vector.extract_strided_slice %14 {offsets = [0, 0], sizes = [8, 128], strides = [1, 1]} : vector<8x256xf32> to vector<8x128xf32>
      %16 = vector.extract_strided_slice %14 {offsets = [0, 128], sizes = [8, 128], strides = [1, 1]} : vector<8x256xf32> to vector<8x128xf32>
      %17 = arith.negf %15 : vector<8x128xf32>
      %18 = math.exp %17 : vector<8x128xf32>
      %cst_12 = arith.constant 1.000000e+00 : f32
      %19 = vector.broadcast %cst_12 : f32 to vector<8x128xf32>
      %20 = arith.addf %19, %18 : vector<8x128xf32>
      %21 = arith.divf %19, %20 : vector<8x128xf32>
      %22 = arith.mulf %15, %21 : vector<8x128xf32>
      %23 = arith.mulf %22, %16 : vector<8x128xf32>
      %24 = arith.truncf %23 : vector<8x128xf32> to vector<8x128xbf16>
      %c0_13 = arith.constant 0 : index
      %c0_14 = arith.constant 0 : index
      %c0_15 = arith.constant 0 : index
      %25 = vector.load %arg7[%c0_13, %c0_14, %c0_15] : memref<1x128x128xbf16, #tpu.memory_space<vmem>>, vector<1x128x128xbf16>
      %26 = vector.shape_cast %25 : vector<1x128x128xbf16> to vector<128x128xbf16>
      %cst_16 = arith.constant dense<0.000000e+00> : vector<8x128xf32>
      %27 = tpu.matmul %24, %26, %cst_16 {dimension_numbers = #tpu.dot_dimension_numbers<[1], [0], [0], [1], [0, 0, 1, 1], [], []>} : vector<8x128xbf16>, vector<128x128xbf16>, vector<8x128xf32> -> vector<8x128xf32>
      %c0_17 = arith.constant 0 : index
      %c0_18 = arith.constant 0 : index
      %28 = vector.load %arg8[%c0_17, %c0_18] : memref<8x128xf32, #tpu.memory_space<vmem>>, vector<8x128xf32>
      %c0_19 = arith.constant 0 : index
      %c0_20 = arith.constant 0 : index
      %c0_21 = arith.constant 0 : index
      %29 = vector.load %arg4[%c0_19, %c0_20, %c0_21] : memref<1x8x1xf32, #tpu.memory_space<vmem>>, vector<1x8x1xf32>
      %30 = vector.shape_cast %29 : vector<1x8x1xf32> to vector<8x1xf32>
      %31 = vector.broadcast %30 : vector<8x1xf32> to vector<8x128xf32>
      %32 = arith.mulf %31, %27 : vector<8x128xf32>
      %33 = arith.addf %28, %32 : vector<8x128xf32>
      %c0_22 = arith.constant 0 : index
      %c0_23 = arith.constant 0 : index
      %34 = vector.load %arg8[%c0_22, %c0_23] : memref<8x128xf32, #tpu.memory_space<vmem>>, vector<8x128xf32>
      tpu.vector_store %arg8[%c0_22, %c0_23], %33 {strides = array<i32>} : memref<8x128xf32, #tpu.memory_space<vmem>>, vector<8x128xf32>,
      %35 = arith.mulf %27, %27 : vector<8x128xf32>
      %cst_24 = arith.constant dense<0.000000e+00> : vector<8xf32>
      %36 = vector.multi_reduction <add>, %35, %cst_24 [1] : vector<8x128xf32> to vector<8xf32>
      %37 = vector.shape_cast %36 : vector<8xf32> to vector<8x1xf32>
      %38 = math.sqrt %37 : vector<8x1xf32>
      %c0_25 = arith.constant 0 : index
      %c0_26 = arith.constant 0 : index
      %c0_27 = arith.constant 0 : index
      %39 = vector.load %arg5[%c0_25, %c0_26, %c0_27] : memref<1x8x1xf32, #tpu.memory_space<vmem>>, vector<1x8x1xf32>
      %40 = vector.shape_cast %39 : vector<1x8x1xf32> to vector<8x1xf32>
      %41 = arith.mulf %40, %38 : vector<8x1xf32>
      %42 = vector.shape_cast %41 : vector<8x1xf32> to vector<1x8x1xf32>
      %cst_28 = arith.constant dense<0.000000e+00> : vector<1xf32>
      %43 = vector.multi_reduction <add>, %42, %cst_28 [1, 2] : vector<1x8x1xf32> to vector<1xf32>
      %44 = vector.shape_cast %43 : vector<1xf32> to vector<1x1x1xf32>
      %45 = vector.extract %44[0, 0, 0] : f32 from vector<1x1x1xf32>
      %46 = vector.broadcast %45 : f32 to vector<1x1x1x128xf32>
      %c0_29 = arith.constant 0 : index
      %c0_30 = arith.constant 0 : index
      %c0_31 = arith.constant 0 : index
      %c0_32 = arith.constant 0 : index
      %47 = vector.load %arg9[%c0_29, %c0_30, %c0_31, %c0_32] : memref<1x1x1x128xf32, #tpu.memory_space<vmem>>, vector<1x1x1x128xf32>
      tpu.vector_store %arg9[%c0_29, %c0_30, %c0_31, %c0_32], %46 {strides = array<i32>} : memref<1x1x1x128xf32, #tpu.memory_space<vmem>>, vector<1x1x1x128xf32>,
    } else {
    }
    return
  }
  func.func @transform_0(%arg0: i32, %arg1: i32, %arg2: memref<2x8xi32, #tpu.memory_space<smem>>) -> (i32, i32) {
    %c0_i32 = arith.constant 0 : i32
    %c0_i32_0 = arith.constant 0 : i32
    return %arg0, %c0_i32 : i32, i32
  }
  func.func @transform_1(%arg0: i32, %arg1: i32, %arg2: memref<2x8xi32, #tpu.memory_space<smem>>) -> (i32, i32, i32) {
    %c0_i32 = arith.constant 0 : i32
    %c0_i32_0 = arith.constant 0 : i32
    return %arg1, %arg0, %c0_i32 : i32, i32, i32
  }
  func.func @transform_2(%arg0: i32, %arg1: i32, %arg2: memref<2x8xi32, #tpu.memory_space<smem>>) -> (i32, i32, i32) {
    %c0_i32 = arith.constant 0 : i32
    %c0_i32_0 = arith.constant 0 : i32
    return %arg1, %arg0, %c0_i32 : i32, i32, i32
  }
  func.func @transform_3(%arg0: i32, %arg1: i32, %arg2: memref<2x8xi32, #tpu.memory_space<smem>>) -> (i32, i32, i32) {
    %c0_i32 = arith.constant 0 : i32
    %c0_i32_0 = arith.constant 0 : i32
    %c0_i32_1 = arith.constant 0 : i32
    return %arg1, %c0_i32, %c0_i32_0 : i32, i32, i32
  }
  func.func @transform_4(%arg0: i32, %arg1: i32, %arg2: memref<2x8xi32, #tpu.memory_space<smem>>) -> (i32, i32, i32) {
    %c0_i32 = arith.constant 0 : i32
    %c0_i32_0 = arith.constant 0 : i32
    %c0_i32_1 = arith.constant 0 : i32
    return %arg1, %c0_i32, %c0_i32_0 : i32, i32, i32
  }
  func.func @transform_5(%arg0: i32, %arg1: i32, %arg2: memref<2x8xi32, #tpu.memory_space<smem>>) -> (i32, i32) {
    %c0_i32 = arith.constant 0 : i32
    %c0_i32_0 = arith.constant 0 : i32
    return %arg0, %c0_i32 : i32, i32
  }
  func.func @transform_6(%arg0: i32, %arg1: i32, %arg2: memref<2x8xi32, #tpu.memory_space<smem>>) -> (i32, i32, i32, i32) {
    %c0_i32 = arith.constant 0 : i32
    %c0_i32_0 = arith.constant 0 : i32
    %c0_i32_1 = arith.constant 0 : i32
    return %arg0, %arg1, %c0_i32, %c0_i32_0 : i32, i32, i32, i32
  }
}

</mosaic_0001>

<llo_original>
// kernel: olmoe_importance_forward.2
$region0: #{olmoe_importance_forward.2}
  #allocation0 [shape = 'u32[]', space=smem, size = 0x4, offset = 0x4, fixed_abs, tag = 'smem constant byte address 0x4 - core index']
  #allocation1 [shape = 'u32[144,128]{1,0:T(1,128)}', space=vmem, size = 0x12000, scoped, tag = 'internal scratch']
  %s0 = inlined_call_operand.hbm [shape: f32[16,128], index: 0, kind: input, shape index: {}]
  %s1 = inlined_call_operand.vmem [shape: f32[128,128], index: 1, kind: input, shape index: {}]
  %s2 = inlined_call_operand.vmem [shape: f32[16,128], index: 2, kind: output, shape index: {0}]
  %s3 = inlined_call_operand.vmem [shape: bf16[16,128], index: 3, kind: output, shape index: {1}]
  %s4 = inlined_call_operand.vmem [shape: f32[16,1], index: 4, kind: output, shape index: {2}]
  %5 = xla_tuple %s2, %s3, %s4
  %s6 = sld [smem:[#allocation0]]
  $region61: #{olmoe_importance_forward.2} parent=0
    _
  %s8 = ssub.s32 1, %s6
  %s9 = scalar_select 0, %s8, %s6
  $region1: #{olmoe_importance_forward.2} parent=0
    #allocation2 [shape = 'u8[8192]{0}', space=vmem, size = 0x2000, scoped, tag = 'input window, operand 0']
    #allocation3 [shape = 's32[2]{0}', space=sflag, size = 0x8, scoped, tag = 'scoped memory for olmoe_importance_forward.2']
    %10 = vsyncpa [#allocation3], 0
    %s11 = scalar_lea.sflag [#allocation3], 1
    %12 = vsyncpa %s11, 0
    loop: start=0, step=1, limit=4
    $region2: #{olmoe_importance_forward.2} parent=1 // loop_pre_header
      _
    $region3: #{olmoe_importance_forward.2} parent=1 // loop_header
      %s14 = sphi 0, %s18
      %p15 = scmp.ge.s32.totalorder %s14, 4
      %s24 = sphi 0, %s26
      %s27 = sphi 0, %s24
      %s28 = sphi 0, %s27
      %s44 = sphi 0, %s28
      %s48 = sphi 0, %s48
      %s50 = sphi 0, %s48
      %s51 = sphi 0, %s50
      %s65 = sphi 0, %s51
      %s71 = sphi 0, %s73
      %s74 = sphi 0, %s71
      %s75 = sphi 0, %s74
      %s91 = sphi 0, %s75
      %s97 = sphi 0, %s99
      %s100 = sphi 0, %s97
      %s101 = sphi 0, %s100
      %s117 = sphi 0, %s101
      %s123 = sphi 0, %s125
      %s126 = sphi 0, %s123
      %s127 = sphi 0, %s126
      %s143 = sphi 0, %s127
    $region4: #{olmoe_importance_forward.2} parent=1 // loop_header_branch
      %17 = sbr.rel (%p15) target = $region8
    $region5: #{olmoe_importance_forward.2} parent=1 // loop_body
      %s19 = ssub.s32 %s14, 1
      %s20 = ssub.s32 %s14, 2
      %s21 = sadd.s32 %s14, 1
      %s22 = ssub.s32 %s14, %s21
      %p23 = scmp.eq.s32.totalorder %s22, 0
      %s25 = sadd.s32 %s24, 1
      %s26 = scalar_select %p23, %s24, %s25
      %p29 = pneg %p23
      %p30 = scmp.eq.s32.totalorder %s14, 1
      %p31 = por %p29, %p30
      %p32 = scmp.ne.s32.totalorder %s24, %s27
      %p33 = scmp.eq.s32.totalorder %s14, 0
      %p34 = por %p32, %p33
      %p35 = scmp.ne.s32.totalorder %s24, %s27
      %p36 = scmp.eq.s32.totalorder %s19, 1
      %p37 = por %p35, %p36
      %p38 = scmp.ne.s32.totalorder %s27, %s28
      %p39 = scmp.eq.s32.totalorder %s19, 0
      %p40 = por %p38, %p39
      %p41 = scmp.ne.s32.totalorder %s27, %s28
      %p42 = scmp.eq.s32.totalorder %s20, 1
      %p43 = por %p41, %p42
      %p45 = scmp.ne.s32.totalorder %s28, %s44
      %p46 = scmp.eq.s32.totalorder %s20, 0
      %p47 = por %p45, %p46
      %s49 = sadd.s32 %s48, 1
      %p52 = scmp.eq.s32.totalorder %s14, 1
      %p53 = scmp.ne.s32.totalorder %s48, %s50
      %p54 = scmp.eq.s32.totalorder %s14, 0
      %p55 = por %p53, %p54
      %p56 = scmp.ne.s32.totalorder %s48, %s50
      %p57 = scmp.eq.s32.totalorder %s19, 1
      %p58 = por %p56, %p57
      %p59 = scmp.ne.s32.totalorder %s50, %s51
      %p60 = scmp.eq.s32.totalorder %s19, 0
      %p61 = por %p59, %p60
      %p62 = scmp.ne.s32.totalorder %s50, %s51
      %p63 = scmp.eq.s32.totalorder %s20, 1
      %p64 = por %p62, %p63
      %p66 = scmp.ne.s32.totalorder %s51, %s65
      %p67 = scmp.eq.s32.totalorder %s20, 0
      %p68 = por %p66, %p67
      %s69 = ssub.s32 %s14, %s21
      %p70 = scmp.eq.s32.totalorder %s69, 0
      %s72 = sadd.s32 %s71, 1
      %s73 = scalar_select %p70, %s71, %s72
      %p76 = pneg %p70
      %p77 = scmp.eq.s32.totalorder %s14, 1
      %p78 = por %p76, %p77
      %p79 = scmp.ne.s32.totalorder %s71, %s74
      %p80 = scmp.eq.s32.totalorder %s14, 0
      %p81 = por %p79, %p80
      %p82 = scmp.ne.s32.totalorder %s71, %s74
      %p83 = scmp.eq.s32.totalorder %s19, 1
      %p84 = por %p82, %p83
      %p85 = scmp.ne.s32.totalorder %s74, %s75
      %p86 = scmp.eq.s32.totalorder %s19, 0
      %p87 = por %p85, %p86
      %p88 = scmp.ne.s32.totalorder %s74, %s75
      %p89 = scmp.eq.s32.totalorder %s20, 1
      %p90 = por %p88, %p89
      %p92 = scmp.ne.s32.totalorder %s75, %s91
      %p93 = scmp.eq.s32.totalorder %s20, 0
      %p94 = por %p92, %p93
      %s95 = ssub.s32 %s14, %s21
      %p96 = scmp.eq.s32.totalorder %s95, 0
      %s98 = sadd.s32 %s97, 1
      %s99 = scalar_select %p96, %s97, %s98
      %p102 = pneg %p96
      %p103 = scmp.eq.s32.totalorder %s14, 1
      %p104 = por %p102, %p103
      %p105 = scmp.ne.s32.totalorder %s97, %s100
      %p106 = scmp.eq.s32.totalorder %s14, 0
      %p107 = por %p105, %p106
      %p108 = scmp.ne.s32.totalorder %s97, %s100
      %p109 = scmp.eq.s32.totalorder %s19, 1
      %p110 = por %p108, %p109
      %p111 = scmp.ne.s32.totalorder %s100, %s101
      %p112 = scmp.eq.s32.totalorder %s19, 0
      %p113 = por %p111, %p112
      %p114 = scmp.ne.s32.totalorder %s100, %s101
      %p115 = scmp.eq.s32.totalorder %s20, 1
      %p116 = por %p114, %p115
      %p118 = scmp.ne.s32.totalorder %s101, %s117
      %p119 = scmp.eq.s32.totalorder %s20, 0
      %p120 = por %p118, %p119
      %s121 = ssub.s32 %s14, %s21
      %p122 = scmp.eq.s32.totalorder %s121, 0
      %s124 = sadd.s32 %s123, 1
      %s125 = scalar_select %p122, %s123, %s124
      %p128 = pneg %p122
      %p129 = scmp.eq.s32.totalorder %s14, 1
      %p130 = por %p128, %p129
      %p131 = scmp.ne.s32.totalorder %s123, %s126
      %p132 = scmp.eq.s32.totalorder %s14, 0
      %p133 = por %p131, %p132
      %p134 = scmp.ne.s32.totalorder %s123, %s126
      %p135 = scmp.eq.s32.totalorder %s19, 1
      %p136 = por %p134, %p135
      %p137 = scmp.ne.s32.totalorder %s126, %s127
      %p138 = scmp.eq.s32.totalorder %s19, 0
      %p139 = por %p137, %p138
      %p140 = scmp.ne.s32.totalorder %s126, %s127
      %p141 = scmp.eq.s32.totalorder %s20, 1
      %p142 = por %p140, %p141
      %p144 = scmp.ne.s32.totalorder %s127, %s143
      %p145 = scmp.eq.s32.totalorder %s20, 0
      %p146 = por %p144, %p145
      %p147 = scmp.le.s32.totalorder 1, %s14
      %p148 = scmp.lt.s32.totalorder %s14, 3
      %p149 = pnand %p147, %p148
      %p150 = pneg %p149
      // Predicated region
      $region9: #{olmoe_importance_forward.2} parent=5 // pred_check
        _
      $region10: #{olmoe_importance_forward.2} parent=5 // pred_check_branch
        %152 = sbr.rel (%p149) target = $region12
      $region11: #{olmoe_importance_forward.2} parent=5 // pred_region
        %s153 = ssub.s32 %s14, 1
        // Predicated region
        $region13: #{olmoe_importance_forward.2} parent=11 // pred_check
          %p154 = pneg %p61
        $region14: #{olmoe_importance_forward.2} parent=11 // pred_check_branch
          %156 = sbr.rel (%p154) target = $region16
        $region15: #{olmoe_importance_forward.2} parent=11 // pred_region
          _
        $region16: #{olmoe_importance_forward.2} parent=11 // pred_fallthru
          _
      $region12: #{olmoe_importance_forward.2} parent=5 // pred_fallthru
        _
      %p157 = scmp.lt.s32.totalorder %s14, 2
      // Predicated region
      $region17: #{olmoe_importance_forward.2} parent=5 // pred_check
        %p158 = pneg %p157
      $region18: #{olmoe_importance_forward.2} parent=5 // pred_check_branch
        %160 = sbr.rel (%p158) target = $region20
      $region19: #{olmoe_importance_forward.2} parent=5 // pred_region
        // Predicated region
        $region21: #{olmoe_importance_forward.2} parent=19 // pred_check
          %p161 = pneg %p34
        $region22: #{olmoe_importance_forward.2} parent=19 // pred_check_branch
          %163 = sbr.rel (%p161) target = $region24
        $region23: #{olmoe_importance_forward.2} parent=19 // pred_region
          %s164 = sand.u32 %s24, 1
          %s165 = scalar_lea.sflag [#allocation3], %s164
          %s166 = sand.u32 %s24, 1
          %s167 = smul.addr %s166, 8
          %s168 = scalar_lea.vmem [#allocation2], %s167
          %s170 = ssub.s32 128, 128
          %171 = vsyncadd %s165, %s170
          %s172 = smul.addr %s14, 128
          %s173 = scalar_lea.hbm %s0, %s172
          %s175 = sshll.u32 %s168, 4
          %s176 = int_to_ptr.vmem [resolvable:$true] %s175
          %178 = dma.hbm_to_vmem [thread:$0]  %s173, 128, %s176, %s165
        $region24: #{olmoe_importance_forward.2} parent=19 // pred_fallthru
          _
      $region20: #{olmoe_importance_forward.2} parent=5 // pred_fallthru
        _
      %p179 = scmp.le.s32.totalorder 1, %s14
      %p180 = scmp.lt.s32.totalorder %s14, 3
      %p181 = pnand %p179, %p180
      %p182 = pneg %p181
      // Predicated region
      $region25: #{olmoe_importance_forward.2} parent=5 // pred_check
        _
      $region26: #{olmoe_importance_forward.2} parent=5 // pred_check_branch
        %184 = sbr.rel (%p181) target = $region28
      $region27: #{olmoe_importance_forward.2} parent=5 // pred_region
        %s185 = ssub.s32 %s14, 1
        %s186 = sand.u32 %s27, 1
        %s187 = scalar_lea.sflag [#allocation3], %s186
        %s188 = sand.u32 %s27, 1
        %s189 = smul.addr %s188, 8
        %s190 = scalar_lea.vmem [#allocation2], %s189
        // Predicated region
        $region29: #{olmoe_importance_forward.2} parent=27 // pred_check
          %p191 = pneg %p40
        $region30: #{olmoe_importance_forward.2} parent=27 // pred_check_branch
          %193 = sbr.rel (%p191) target = $region32
        $region31: #{olmoe_importance_forward.2} parent=27 // pred_region
          %194 = dma.done %s187, 128
        $region32: #{olmoe_importance_forward.2} parent=27 // pred_fallthru
          _
        %s195 = sand.u32 %s27, 1
        %s196 = scalar_lea.sflag [#allocation3], %s195
        %s197 = sand.u32 %s27, 1
        %s198 = smul.addr %s197, 8
        %s199 = scalar_lea.vmem [#allocation2], %s198
        %p200 = pneg %p40
        %p201 = pneg %p37
        %p202 = pneg %p61
        %p203 = pneg %p58
        %p204 = pneg %p87
        %p205 = pneg %p84
        %p206 = scmp.lt.s32.totalorder %s19, 1
        %s207 = scalar_select %p206, %s19, 1
        %s208 = smul.addr %s207, 8
        %s209 = scalar_lea.vmem %s2, %s208
        %p210 = pneg %p113
        %p211 = pneg %p110
        %p212 = scmp.lt.s32.totalorder %s19, 1
        %s213 = scalar_select %p212, %s19, 1
        %s214 = smul.addr %s213, 4
        %s215 = scalar_lea.vmem %s3, %s214
        %p216 = pneg %p139
        %p217 = pneg %p136
        %p218 = scmp.lt.s32.totalorder %s19, 1
        %s219 = scalar_select %p218, %s19, 1
        %s220 = smul.addr %s219, 8
        %s221 = scalar_lea.vmem %s4, %s220
        %p222 = scmp.lt.s32.totalorder %s19, 1
        %s223 = scalar_select %p222, %s19, 1
        %s224 = smul.addr %s223, 8
        %s225 = scalar_lea.vmem %s2, %s224
        %p226 = scmp.lt.s32.totalorder %s19, 1
        %s227 = scalar_select %p226, %s19, 1
        %s228 = smul.addr %s227, 4
        %s229 = scalar_lea.vmem %s3, %s228
        %p230 = scmp.lt.s32.totalorder %s19, 1
        %s231 = scalar_select %p230, %s19, 1
        %s232 = smul.addr %s231, 8
        %s233 = scalar_lea.vmem %s4, %s232
        %v234 = vld [vmem:[%s190] sm:$0xff]
        %v235 = vld [vmem:[%s1] sm:$0xff]
        %v236 = vld [vmem:[%s1 + $0x8] sm:$0xff]
        %v237 = vld [vmem:[%s1 + $0x10] sm:$0xff]
        %v238 = vld [vmem:[%s1 + $0x18] sm:$0xff]
        %v239 = vld [vmem:[%s1 + $0x20] sm:$0xff]
        %v240 = vld [vmem:[%s1 + $0x28] sm:$0xff]
        %v241 = vld [vmem:[%s1 + $0x30] sm:$0xff]
        %v242 = vld [vmem:[%s1 + $0x38] sm:$0xff]
        %v243 = vld [vmem:[%s1 + $0x40] sm:$0xff]
        %v244 = vld [vmem:[%s1 + $0x48] sm:$0xff]
        %v245 = vld [vmem:[%s1 + $0x50] sm:$0xff]
        %v246 = vld [vmem:[%s1 + $0x58] sm:$0xff]
        %v247 = vld [vmem:[%s1 + $0x60] sm:$0xff]
        %v248 = vld [vmem:[%s1 + $0x68] sm:$0xff]
        %v249 = vld [vmem:[%s1 + $0x70] sm:$0xff]
        %v250 = vld [vmem:[%s1 + $0x78] sm:$0xff]
        %251 = vmatprep.subr.mxu0 0.0
        %252 = vmatpush1.msra.mxu0 %v235
        %253 = vmatprep.subr.mxu0 0.0
        %254 = vmatpush1.msra.mxu0 %v236
        %255 = vmatprep.subr.mxu0 0.0
        %256 = vmatpush1.msra.mxu0 %v237
        %257 = vmatprep.subr.mxu0 0.0
        %258 = vmatpush1.msra.mxu0 %v238
        %259 = vmatprep.subr.mxu0 0.0
        %260 = vmatpush1.msra.mxu0 %v239
        %261 = vmatprep.subr.mxu0 0.0
        %262 = vmatpush1.msra.mxu0 %v240
        %263 = vmatprep.subr.mxu0 0.0
        %264 = vmatpush1.msra.mxu0 %v241
        %265 = vmatprep.subr.mxu0 0.0
        %266 = vmatpush1.msra.mxu0 %v242
        %267 = vmatprep.subr.mxu0 0.0
        %268 = vmatpush1.msra.mxu0 %v243
        %269 = vmatprep.subr.mxu0 0.0
        %270 = vmatpush1.msra.mxu0 %v244
        %271 = vmatprep.subr.mxu0 0.0
        %272 = vmatpush1.msra.mxu0 %v245
        %273 = vmatprep.subr.mxu0 0.0
        %274 = vmatpush1.msra.mxu0 %v246
        %275 = vmatprep.subr.mxu0 0.0
        %276 = vmatpush1.msra.mxu0 %v247
        %277 = vmatprep.subr.mxu0 0.0
        %278 = vmatpush1.msra.mxu0 %v248
        %279 = vmatprep.subr.mxu0 0.0
        %280 = vmatpush1.msra.mxu0 %v249
        %281 = vmatprep.subr.mxu0 0.0
        %282 = vmatpush1.msra.mxu0 %v250
        %283 = vmatprep.subr.mxu0 0.0
        %284 = vmatpush1.msra.mxu0 0.0
        %285 = vmatprep.subr.mxu0 0.0
        %286 = vmatpush1.msra.mxu0 0.0
        %287 = vmatprep.subr.mxu0 0.0
        %288 = vmatpush1.msra.mxu0 0.0
        %289 = vmatprep.subr.mxu0 0.0
        %290 = vmatpush1.msra.mxu0 0.0
        %291 = vmatprep.subr.mxu0 0.0
        %292 = vmatpush1.msra.mxu0 0.0
        %293 = vmatprep.subr.mxu0 0.0
        %294 = vmatpush1.msra.mxu0 0.0
        %295 = vmatprep.subr.mxu0 0.0
        %296 = vmatpush1.msra.mxu0 0.0
        %297 = vmatprep.subr.mxu0 0.0
        %298 = vmatpush1.msra.mxu0 0.0
        %299 = vmatprep.subr.mxu0 0.0
        %300 = vmatpush1.msra.mxu0 0.0
        %301 = vmatprep.subr.mxu0 0.0
        %302 = vmatpush1.msra.mxu0 0.0
        %303 = vmatprep.subr.mxu0 0.0
        %304 = vmatpush1.msra.mxu0 0.0
        %305 = vmatprep.subr.mxu0 0.0
        %306 = vmatpush1.msra.mxu0 0.0
        %307 = vmatprep.subr.mxu0 0.0
        %308 = vmatpush1.msra.mxu0 0.0
        %309 = vmatprep.subr.mxu0 0.0
        %310 = vmatpush1.msra.mxu0 0.0
        %311 = vmatprep.subr.mxu0 0.0
        %312 = vmatpush1.msra.mxu0 0.0
        %313 = vmatprep.subr.mxu0 0.0
        %314 = vmatpush1.msra.mxu0 0.0
        %315 = vmatprep.mubr.f32.mxu0 0.0
        %316 = vmatmul.mubr.f32.gmra.mrb[0].mxu0 %v234
        %v317 = vpop.f32.mrb[0].mxu0
        %v318 = vadd.f32 0.0, %v317
        %v319 = vpop.f32.mrb[0].mxu0
        %320 = vdwg.mxu0
        %321 = vst [vmem:[%s225] sm:$0xff] %v318
        %v322 = vpack.c.bf16 %v234, %v234
        %323 = vst [vmem:[%s229] sm:$0xf] %v322
        %v324 = vmul.f32 %v234, %v234
        %325 = vadd.xlane.f32.xlu0 %v324
        %v326 = vpop.xlane.xlu0 %325
        %v327 = vrsqrt.pop %v326
        %v328 = vmul.f32 %v326, %v327
        %vm329 = vcmp.eq.f32.partialorder %v326, inf
        %v330 = vsel %vm329, %v326, %v328
        %vm331 = vcmp.eq.f32.partialorder %v326, 0.0
        %v332 = vand.u32 %v326, 2147483648
        %v333 = vsel %vm331, %v332, %v330
        %vm334 = vcmask 7168
        %335 = vst.msk [vmem:[%s233] sm:$0xff] %vm334, %v333
        %p336 = scmp.lt.s32.totalorder %s19, 1
        %s337 = scalar_select %p336, %s19, 1
        %s338 = smul.addr %s337, 8
        %s339 = scalar_lea.vmem %s2, %s338
        %p340 = scmp.lt.s32.totalorder %s19, 1
        %s341 = scalar_select %p340, %s19, 1
        %s342 = smul.addr %s341, 4
        %s343 = scalar_lea.vmem %s3, %s342
        %p344 = scmp.lt.s32.totalorder %s19, 1
        %s345 = scalar_select %p344, %s19, 1
        %s346 = smul.addr %s345, 8
        %s347 = scalar_lea.vmem %s4, %s346
        // Predicated region
        $region33: #{olmoe_importance_forward.2} parent=27 // pred_check
          %p348 = pneg %p84
        $region34: #{olmoe_importance_forward.2} parent=27 // pred_check_branch
          %350 = sbr.rel (%p348) target = $region36
        $region35: #{olmoe_importance_forward.2} parent=27 // pred_region
          _
        $region36: #{olmoe_importance_forward.2} parent=27 // pred_fallthru
          _
        // Predicated region
        $region37: #{olmoe_importance_forward.2} parent=27 // pred_check
          %p351 = pneg %p110
        $region38: #{olmoe_importance_forward.2} parent=27 // pred_check_branch
          %353 = sbr.rel (%p351) target = $region40
        $region39: #{olmoe_importance_forward.2} parent=27 // pred_region
          _
        $region40: #{olmoe_importance_forward.2} parent=27 // pred_fallthru
          _
        // Predicated region
        $region41: #{olmoe_importance_forward.2} parent=27 // pred_check
          %p354 = pneg %p136
        $region42: #{olmoe_importance_forward.2} parent=27 // pred_check_branch
          %356 = sbr.rel (%p354) target = $region44
        $region43: #{olmoe_importance_forward.2} parent=27 // pred_region
          _
        $region44: #{olmoe_importance_forward.2} parent=27 // pred_fallthru
          _
      $region28: #{olmoe_importance_forward.2} parent=5 // pred_fallthru
        _
      %p357 = scmp.le.s32.totalorder 2, %s14
      // Predicated region
      $region45: #{olmoe_importance_forward.2} parent=5 // pred_check
        %p358 = pneg %p357
      $region46: #{olmoe_importance_forward.2} parent=5 // pred_check_branch
        %360 = sbr.rel (%p358) target = $region48
      $region47: #{olmoe_importance_forward.2} parent=5 // pred_region
        %s361 = ssub.s32 %s14, 2
        // Predicated region
        $region49: #{olmoe_importance_forward.2} parent=47 // pred_check
          %p362 = pneg %p90
        $region50: #{olmoe_importance_forward.2} parent=47 // pred_check_branch
          %364 = sbr.rel (%p362) target = $region52
        $region51: #{olmoe_importance_forward.2} parent=47 // pred_region
          %p365 = scmp.lt.s32.totalorder %s20, 1
          %s366 = scalar_select %p365, %s20, 1
          %s367 = smul.addr %s366, 8
          %s368 = scalar_lea.vmem %s2, %s367
        $region52: #{olmoe_importance_forward.2} parent=47 // pred_fallthru
          _
        // Predicated region
        $region53: #{olmoe_importance_forward.2} parent=47 // pred_check
          %p369 = pneg %p116
        $region54: #{olmoe_importance_forward.2} parent=47 // pred_check_branch
          %371 = sbr.rel (%p369) target = $region56
        $region55: #{olmoe_importance_forward.2} parent=47 // pred_region
          %p372 = scmp.lt.s32.totalorder %s20, 1
          %s373 = scalar_select %p372, %s20, 1
          %s374 = smul.addr %s373, 4
          %s375 = scalar_lea.vmem %s3, %s374
        $region56: #{olmoe_importance_forward.2} parent=47 // pred_fallthru
          _
        // Predicated region
        $region57: #{olmoe_importance_forward.2} parent=47 // pred_check
          %p376 = pneg %p142
        $region58: #{olmoe_importance_forward.2} parent=47 // pred_check_branch
          %378 = sbr.rel (%p376) target = $region60
        $region59: #{olmoe_importance_forward.2} parent=47 // pred_region
          %p379 = scmp.lt.s32.totalorder %s20, 1
          %s380 = scalar_select %p379, %s20, 1
          %s381 = smul.addr %s380, 8
          %s382 = scalar_lea.vmem %s4, %s381
        $region60: #{olmoe_importance_forward.2} parent=47 // pred_fallthru
          _
      $region48: #{olmoe_importance_forward.2} parent=5 // pred_fallthru
        _
    $region6: #{olmoe_importance_forward.2} parent=1 // loop_footer
      %s18 = sadd.s32 1, %s14
    $region7: #{olmoe_importance_forward.2} parent=1 // loop_footer_branch
      %13 = sbr.rel target = $region3
    $region8: #{olmoe_importance_forward.2} parent=1 // loop_exit
      _
    %383 = vsyncpa [#allocation3], 1
    %s384 = scalar_lea.sflag [#allocation3], 1
    %385 = vsyncpa %s384, 1

// kernel: olmoe_importance_forward.3
$region0: #{olmoe_importance_forward.3}
  #allocation0 [shape = 'u32[]', space=smem, size = 0x4, offset = 0x4, fixed_abs, tag = 'smem constant byte address 0x4 - core index']
  #allocation1 [shape = 'u32[144,128]{1,0:T(1,128)}', space=vmem, size = 0x12000, scoped, tag = 'internal scratch']
  #allocation2 [shape = 's32[1]{0}', space=sflag, size = 0x4, scoped, tag = 'scoped memory for olmoe_importance_forward.3']
  #allocation3 [shape = 'u8[1024]{0}', space=smem, size = 0x400, scoped, tag = 'prefetched SMEM operand 0']
  %s0 = inlined_call_operand.vmem [shape: s32[2,8], index: 0, kind: input, shape index: {}]
  %s1 = inlined_call_operand.vmem [shape: bf16[16,128], index: 1, kind: input, shape index: {}]
  %s2 = inlined_call_operand.vmem [shape: f32[8,16,1], index: 2, kind: input, shape index: {}]
  %s3 = inlined_call_operand.vmem [shape: f32[8,16,1], index: 3, kind: input, shape index: {}]
  %s4 = inlined_call_operand.vmem [shape: bf16[8,128,256], index: 4, kind: input, shape index: {}]
  %s5 = inlined_call_operand.vmem [shape: bf16[8,128,128], index: 5, kind: input, shape index: {}]
  %s6 = inlined_call_operand.hbm [shape: f32[16,128], index: 6, kind: output, shape index: {0}]
  %s7 = inlined_call_operand.vmem [shape: f32[2,8,1,128], index: 7, kind: output, shape index: {1}]
  %8 = xla_tuple %s6, %s7
  %s9 = sld [smem:[#allocation0]]
  $region69: #{olmoe_importance_forward.3} parent=0
    _
  %s11 = ssub.s32 1, %s9
  %s12 = scalar_select 0, %s11, %s9
  %s13 = sshll.u32 %s0, 4
  %s14 = int_to_ptr.vmem [resolvable:$true] %s13
  %16 = dma.vmem_to_smem %s14, 32, [#allocation3], [#allocation2]
  %17 = dma.done [#allocation2], 32
  %18 = sfence
  $region1: #{olmoe_importance_forward.3} parent=0
    #allocation4 [shape = 'u8[8192]{0}', space=vmem, size = 0x2000, scoped, tag = 'output window, operand 0']
    #allocation5 [shape = 's32[2]{0}', space=sflag, size = 0x8, scoped, tag = 'scoped memory for olmoe_importance_forward.3']
    %19 = vsyncpa [#allocation5], 0
    %s20 = scalar_lea.sflag [#allocation5], 1
    %21 = vsyncpa %s20, 0
    loop: start=0, step=1, limit=18
    $region2: #{olmoe_importance_forward.3} parent=1 // loop_pre_header
      _
    $region3: #{olmoe_importance_forward.3} parent=1 // loop_header
      %s23 = sphi 0, %s27
      %p24 = scmp.ge.s32.totalorder %s23, 18
      %s30 = sphi 0, %s42
      %s31 = sphi 0, %s38
      %s32 = sphi 0, %s30
      %s33 = sphi 0, %s31
      %s34 = sphi 0, %s32
      %s35 = sphi 0, %s33
      %s45 = sphi 0, %s47
      %s48 = sphi 0, %s45
      %s49 = sphi 0, %s48
      %s65 = sphi 0, %s49
      %s73 = sphi 0, %s75
      %s76 = sphi 0, %s73
      %s77 = sphi 0, %s76
      %s93 = sphi 0, %s77
      %s101 = sphi 0, %s103
      %s104 = sphi 0, %s101
      %s105 = sphi 0, %s104
      %s121 = sphi 0, %s105
      %s127 = sphi 0, %s129
      %s130 = sphi 0, %s127
      %s131 = sphi 0, %s130
      %s147 = sphi 0, %s131
      %s153 = sphi 0, %s155
      %s156 = sphi 0, %s153
      %s157 = sphi 0, %s156
      %s173 = sphi 0, %s157
      %s179 = sphi 0, %s181
      %s182 = sphi 0, %s179
      %s183 = sphi 0, %s182
      %s199 = sphi 0, %s183
      %s207 = sphi 0, %s209
      %s210 = sphi 0, %s207
      %s211 = sphi 0, %s210
      %s227 = sphi 0, %s211
    $region4: #{olmoe_importance_forward.3} parent=1 // loop_header_branch
      %26 = sbr.rel (%p24) target = $region8
    $region5: #{olmoe_importance_forward.3} parent=1 // loop_body
      %s28 = ssub.s32 %s23, 1
      %s29 = ssub.s32 %s23, 2
      %s36 = sadd.s32 1, %s31
      %p37 = scmp.ge.s32.totalorder %s36, 8
      %s38 = scalar_select %p37, 0, %s36
      %s39 = sadd.s32 1, %s30
      %s40 = scalar_select %p37, %s39, %s30
      %p41 = scmp.ge.s32.totalorder %s40, 2
      %s42 = scalar_select %p41, 0, %s40
      %s43 = ssub.s32 %s30, %s42
      %p44 = scmp.eq.s32.totalorder %s43, 0
      %s46 = sadd.s32 %s45, 1
      %s47 = scalar_select %p44, %s45, %s46
      %p50 = pneg %p44
      %p51 = scmp.eq.s32.totalorder %s23, 15
      %p52 = por %p50, %p51
      %p53 = scmp.ne.s32.totalorder %s45, %s48
      %p54 = scmp.eq.s32.totalorder %s23, 0
      %p55 = por %p53, %p54
      %p56 = scmp.ne.s32.totalorder %s45, %s48
      %p57 = scmp.eq.s32.totalorder %s28, 15
      %p58 = por %p56, %p57
      %p59 = scmp.ne.s32.totalorder %s48, %s49
      %p60 = scmp.eq.s32.totalorder %s28, 0
      %p61 = por %p59, %p60
      %p62 = scmp.ne.s32.totalorder %s48, %s49
      %p63 = scmp.eq.s32.totalorder %s29, 15
      %p64 = por %p62, %p63
      %p66 = scmp.ne.s32.totalorder %s49, %s65
      %p67 = scmp.eq.s32.totalorder %s29, 0
      %p68 = por %p66, %p67
      %s69 = ssub.s32 %s31, %s38
      %s70 = ssub.s32 %s30, %s42
      %s71 = sor.u32 %s69, %s70
      %p72 = scmp.eq.s32.totalorder %s71, 0
      %s74 = sadd.s32 %s73, 1
      %s75 = scalar_select %p72, %s73, %s74
      %p78 = pneg %p72
      %p79 = scmp.eq.s32.totalorder %s23, 15
      %p80 = por %p78, %p79
      %p81 = scmp.ne.s32.totalorder %s73, %s76
      %p82 = scmp.eq.s32.totalorder %s23, 0
      %p83 = por %p81, %p82
      %p84 = scmp.ne.s32.totalorder %s73, %s76
      %p85 = scmp.eq.s32.totalorder %s28, 15
      %p86 = por %p84, %p85
      %p87 = scmp.ne.s32.totalorder %s76, %s77
      %p88 = scmp.eq.s32.totalorder %s28, 0
      %p89 = por %p87, %p88
      %p90 = scmp.ne.s32.totalorder %s76, %s77
      %p91 = scmp.eq.s32.totalorder %s29, 15
      %p92 = por %p90, %p91
      %p94 = scmp.ne.s32.totalorder %s77, %s93
      %p95 = scmp.eq.s32.totalorder %s29, 0
      %p96 = por %p94, %p95
      %s97 = ssub.s32 %s31, %s38
      %s98 = ssub.s32 %s30, %s42
      %s99 = sor.u32 %s97, %s98
      %p100 = scmp.eq.s32.totalorder %s99, 0
      %s102 = sadd.s32 %s101, 1
      %s103 = scalar_select %p100, %s101, %s102
      %p106 = pneg %p100
      %p107 = scmp.eq.s32.totalorder %s23, 15
      %p108 = por %p106, %p107
      %p109 = scmp.ne.s32.totalorder %s101, %s104
      %p110 = scmp.eq.s32.totalorder %s23, 0
      %p111 = por %p109, %p110
      %p112 = scmp.ne.s32.totalorder %s101, %s104
      %p113 = scmp.eq.s32.totalorder %s28, 15
      %p114 = por %p112, %p113
      %p115 = scmp.ne.s32.totalorder %s104, %s105
      %p116 = scmp.eq.s32.totalorder %s28, 0
      %p117 = por %p115, %p116
      %p118 = scmp.ne.s32.totalorder %s104, %s105
      %p119 = scmp.eq.s32.totalorder %s29, 15
      %p120 = por %p118, %p119
      %p122 = scmp.ne.s32.totalorder %s105, %s121
      %p123 = scmp.eq.s32.totalorder %s29, 0
      %p124 = por %p122, %p123
      %s125 = ssub.s32 %s31, %s38
      %p126 = scmp.eq.s32.totalorder %s125, 0
      %s128 = sadd.s32 %s127, 1
      %s129 = scalar_select %p126, %s127, %s128
      %p132 = pneg %p126
      %p133 = scmp.eq.s32.totalorder %s23, 15
      %p134 = por %p132, %p133
      %p135 = scmp.ne.s32.totalorder %s127, %s130
      %p136 = scmp.eq.s32.totalorder %s23, 0
      %p137 = por %p135, %p136
      %p138 = scmp.ne.s32.totalorder %s127, %s130
      %p139 = scmp.eq.s32.totalorder %s28, 15
      %p140 = por %p138, %p139
      %p141 = scmp.ne.s32.totalorder %s130, %s131
      %p142 = scmp.eq.s32.totalorder %s28, 0
      %p143 = por %p141, %p142
      %p144 = scmp.ne.s32.totalorder %s130, %s131
      %p145 = scmp.eq.s32.totalorder %s29, 15
      %p146 = por %p144, %p145
      %p148 = scmp.ne.s32.totalorder %s131, %s147
      %p149 = scmp.eq.s32.totalorder %s29, 0
      %p150 = por %p148, %p149
      %s151 = ssub.s32 %s31, %s38
      %p152 = scmp.eq.s32.totalorder %s151, 0
      %s154 = sadd.s32 %s153, 1
      %s155 = scalar_select %p152, %s153, %s154
      %p158 = pneg %p152
      %p159 = scmp.eq.s32.totalorder %s23, 15
      %p160 = por %p158, %p159
      %p161 = scmp.ne.s32.totalorder %s153, %s156
      %p162 = scmp.eq.s32.totalorder %s23, 0
      %p163 = por %p161, %p162
      %p164 = scmp.ne.s32.totalorder %s153, %s156
      %p165 = scmp.eq.s32.totalorder %s28, 15
      %p166 = por %p164, %p165
      %p167 = scmp.ne.s32.totalorder %s156, %s157
      %p168 = scmp.eq.s32.totalorder %s28, 0
      %p169 = por %p167, %p168
      %p170 = scmp.ne.s32.totalorder %s156, %s157
      %p171 = scmp.eq.s32.totalorder %s29, 15
      %p172 = por %p170, %p171
      %p174 = scmp.ne.s32.totalorder %s157, %s173
      %p175 = scmp.eq.s32.totalorder %s29, 0
      %p176 = por %p174, %p175
      %s177 = ssub.s32 %s30, %s42
      %p178 = scmp.eq.s32.totalorder %s177, 0
      %s180 = sadd.s32 %s179, 1
      %s181 = scalar_select %p178, %s179, %s180
      %p184 = pneg %p178
      %p185 = scmp.eq.s32.totalorder %s23, 15
      %p186 = por %p184, %p185
      %p187 = scmp.ne.s32.totalorder %s179, %s182
      %p188 = scmp.eq.s32.totalorder %s23, 0
      %p189 = por %p187, %p188
      %p190 = scmp.ne.s32.totalorder %s179, %s182
      %p191 = scmp.eq.s32.totalorder %s28, 15
      %p192 = por %p190, %p191
      %p193 = scmp.ne.s32.totalorder %s182, %s183
      %p194 = scmp.eq.s32.totalorder %s28, 0
      %p195 = por %p193, %p194
      %p196 = scmp.ne.s32.totalorder %s182, %s183
      %p197 = scmp.eq.s32.totalorder %s29, 15
      %p198 = por %p196, %p197
      %p200 = scmp.ne.s32.totalorder %s183, %s199
      %p201 = scmp.eq.s32.totalorder %s29, 0
      %p202 = por %p200, %p201
      %s203 = ssub.s32 %s30, %s42
      %s204 = ssub.s32 %s31, %s38
      %s205 = sor.u32 %s203, %s204
      %p206 = scmp.eq.s32.totalorder %s205, 0
      %s208 = sadd.s32 %s207, 1
      %s209 = scalar_select %p206, %s207, %s208
      %p212 = pneg %p206
      %p213 = scmp.eq.s32.totalorder %s23, 15
      %p214 = por %p212, %p213
      %p215 = scmp.ne.s32.totalorder %s207, %s210
      %p216 = scmp.eq.s32.totalorder %s23, 0
      %p217 = por %p215, %p216
      %p218 = scmp.ne.s32.totalorder %s207, %s210
      %p219 = scmp.eq.s32.totalorder %s28, 15
      %p220 = por %p218, %p219
      %p221 = scmp.ne.s32.totalorder %s210, %s211
      %p222 = scmp.eq.s32.totalorder %s28, 0
      %p223 = por %p221, %p222
      %p224 = scmp.ne.s32.totalorder %s210, %s211
      %p225 = scmp.eq.s32.totalorder %s29, 15
      %p226 = por %p224, %p225
      %p228 = scmp.ne.s32.totalorder %s211, %s227
      %p229 = scmp.eq.s32.totalorder %s29, 0
      %p230 = por %p228, %p229
      %p231 = scmp.le.s32.totalorder 1, %s23
      %p232 = scmp.lt.s32.totalorder %s23, 17
      %p233 = pnand %p231, %p232
      %p234 = pneg %p233
      // Predicated region
      $region9: #{olmoe_importance_forward.3} parent=5 // pred_check
        _
      $region10: #{olmoe_importance_forward.3} parent=5 // pred_check_branch
        %236 = sbr.rel (%p233) target = $region12
      $region11: #{olmoe_importance_forward.3} parent=5 // pred_region
        %s237 = ssub.s32 %s23, 1
      $region12: #{olmoe_importance_forward.3} parent=5 // pred_fallthru
        _
      %p238 = scmp.lt.s32.totalorder %s23, 16
      // Predicated region
      $region13: #{olmoe_importance_forward.3} parent=5 // pred_check
        %p239 = pneg %p238
      $region14: #{olmoe_importance_forward.3} parent=5 // pred_check_branch
        %241 = sbr.rel (%p239) target = $region16
      $region15: #{olmoe_importance_forward.3} parent=5 // pred_region
        // Predicated region
        $region17: #{olmoe_importance_forward.3} parent=15 // pred_check
          %p242 = pneg %p55
        $region18: #{olmoe_importance_forward.3} parent=15 // pred_check_branch
          %244 = sbr.rel (%p242) target = $region20
        $region19: #{olmoe_importance_forward.3} parent=15 // pred_region
          %p245 = scmp.lt.s32.totalorder %s30, 1
          %s246 = scalar_select %p245, %s30, 1
          %s247 = smul.addr %s246, 4
          %s248 = scalar_lea.vmem %s1, %s247
        $region20: #{olmoe_importance_forward.3} parent=15 // pred_fallthru
          _
        // Predicated region
        $region21: #{olmoe_importance_forward.3} parent=15 // pred_check
          %p249 = pneg %p83
        $region22: #{olmoe_importance_forward.3} parent=15 // pred_check_branch
          %251 = sbr.rel (%p249) target = $region24
        $region23: #{olmoe_importance_forward.3} parent=15 // pred_region
          %p252 = scmp.lt.s32.totalorder %s31, 7
          %s253 = scalar_select %p252, %s31, 7
          %p254 = scmp.lt.s32.totalorder %s30, 1
          %s255 = scalar_select %p254, %s30, 1
          %s256 = smul.addr %s253, 2
          %s257 = sadd.s32 %s255, %s256
          %s258 = smul.addr %s257, 8
          %s259 = scalar_lea.vmem %s2, %s258
        $region24: #{olmoe_importance_forward.3} parent=15 // pred_fallthru
          _
        // Predicated region
        $region25: #{olmoe_importance_forward.3} parent=15 // pred_check
          %p260 = pneg %p111
        $region26: #{olmoe_importance_forward.3} parent=15 // pred_check_branch
          %262 = sbr.rel (%p260) target = $region28
        $region27: #{olmoe_importance_forward.3} parent=15 // pred_region
          %p263 = scmp.lt.s32.totalorder %s31, 7
          %s264 = scalar_select %p263, %s31, 7
          %p265 = scmp.lt.s32.totalorder %s30, 1
          %s266 = scalar_select %p265, %s30, 1
          %s267 = smul.addr %s264, 2
          %s268 = sadd.s32 %s266, %s267
          %s269 = smul.addr %s268, 8
          %s270 = scalar_lea.vmem %s3, %s269
        $region28: #{olmoe_importance_forward.3} parent=15 // pred_fallthru
          _
        // Predicated region
        $region29: #{olmoe_importance_forward.3} parent=15 // pred_check
          %p271 = pneg %p137
        $region30: #{olmoe_importance_forward.3} parent=15 // pred_check_branch
          %273 = sbr.rel (%p271) target = $region32
        $region31: #{olmoe_importance_forward.3} parent=15 // pred_region
          %p274 = scmp.lt.s32.totalorder %s31, 7
          %s275 = scalar_select %p274, %s31, 7
          %s276 = smul.addr %s275, 32
          %s277 = smul.addr %s276, 4
          %s278 = scalar_lea.vmem %s4, %s277
        $region32: #{olmoe_importance_forward.3} parent=15 // pred_fallthru
          _
        // Predicated region
        $region33: #{olmoe_importance_forward.3} parent=15 // pred_check
          %p279 = pneg %p163
        $region34: #{olmoe_importance_forward.3} parent=15 // pred_check_branch
          %281 = sbr.rel (%p279) target = $region36
        $region35: #{olmoe_importance_forward.3} parent=15 // pred_region
          %p282 = scmp.lt.s32.totalorder %s31, 7
          %s283 = scalar_select %p282, %s31, 7
          %s284 = smul.addr %s283, 16
          %s285 = smul.addr %s284, 4
          %s286 = scalar_lea.vmem %s5, %s285
        $region36: #{olmoe_importance_forward.3} parent=15 // pred_fallthru
          _
      $region16: #{olmoe_importance_forward.3} parent=5 // pred_fallthru
        _
      %p287 = scmp.le.s32.totalorder 1, %s23
      %p288 = scmp.lt.s32.totalorder %s23, 17
      %p289 = pnand %p287, %p288
      %p290 = pneg %p289
      // Predicated region
      $region37: #{olmoe_importance_forward.3} parent=5 // pred_check
        _
      $region38: #{olmoe_importance_forward.3} parent=5 // pred_check_branch
        %292 = sbr.rel (%p289) target = $region40
      $region39: #{olmoe_importance_forward.3} parent=5 // pred_region
        %s293 = ssub.s32 %s23, 1
        %p294 = scmp.lt.s32.totalorder %s32, 1
        %s295 = scalar_select %p294, %s32, 1
        %s296 = smul.addr %s295, 4
        %s297 = scalar_lea.vmem %s1, %s296
        %p298 = pneg %p61
        %p299 = pneg %p58
        %p300 = scmp.lt.s32.totalorder %s33, 7
        %s301 = scalar_select %p300, %s33, 7
        %p302 = scmp.lt.s32.totalorder %s32, 1
        %s303 = scalar_select %p302, %s32, 1
        %s304 = smul.addr %s301, 2
        %s305 = sadd.s32 %s303, %s304
        %s306 = smul.addr %s305, 8
        %s307 = scalar_lea.vmem %s2, %s306
        %p308 = pneg %p89
        %p309 = pneg %p86
        %p310 = scmp.lt.s32.totalorder %s33, 7
        %s311 = scalar_select %p310, %s33, 7
        %p312 = scmp.lt.s32.totalorder %s32, 1
        %s313 = scalar_select %p312, %s32, 1
        %s314 = smul.addr %s311, 2
        %s315 = sadd.s32 %s313, %s314
        %s316 = smul.addr %s315, 8
        %s317 = scalar_lea.vmem %s3, %s316
        %p318 = pneg %p117
        %p319 = pneg %p114
        %p320 = scmp.lt.s32.totalorder %s33, 7
        %s321 = scalar_select %p320, %s33, 7
        %s322 = smul.addr %s321, 32
        %s323 = smul.addr %s322, 4
        %s324 = scalar_lea.vmem %s4, %s323
        %p325 = pneg %p143
        %p326 = pneg %p140
        %p327 = scmp.lt.s32.totalorder %s33, 7
        %s328 = scalar_select %p327, %s33, 7
        %s329 = smul.addr %s328, 16
        %s330 = smul.addr %s329, 4
        %s331 = scalar_lea.vmem %s5, %s330
        %p332 = pneg %p169
        %p333 = pneg %p166
        %p334 = pneg %p195
        %p335 = pneg %p192
        %s336 = sand.u32 %s182, 1
        %s337 = scalar_lea.sflag [#allocation5], %s336
        %s338 = sand.u32 %s182, 1
        %s339 = smul.addr %s338, 8
        %s340 = scalar_lea.vmem [#allocation4], %s339
        %p341 = pneg %p223
        %p342 = pneg %p220
        %p343 = scmp.lt.s32.totalorder %s32, 1
        %s344 = scalar_select %p343, %s32, 1
        %p345 = scmp.lt.s32.totalorder %s33, 7
        %s346 = scalar_select %p345, %s33, 7
        %s347 = smul.addr %s344, 8
        %s348 = sadd.s32 %s346, %s347
        %s349 = scalar_lea.vmem %s7, %s348
        %p350 = scmp.lt.s32.totalorder %s32, 1
        %s351 = scalar_select %p350, %s32, 1
        %s352 = smul.addr %s351, 4
        %s353 = scalar_lea.vmem %s1, %s352
        %p354 = scmp.lt.s32.totalorder %s33, 7
        %s355 = scalar_select %p354, %s33, 7
        %p356 = scmp.lt.s32.totalorder %s32, 1
        %s357 = scalar_select %p356, %s32, 1
        %s358 = smul.addr %s355, 2
        %s359 = sadd.s32 %s357, %s358
        %s360 = smul.addr %s359, 8
        %s361 = scalar_lea.vmem %s2, %s360
        %p362 = scmp.lt.s32.totalorder %s33, 7
        %s363 = scalar_select %p362, %s33, 7
        %p364 = scmp.lt.s32.totalorder %s32, 1
        %s365 = scalar_select %p364, %s32, 1
        %s366 = smul.addr %s363, 2
        %s367 = sadd.s32 %s365, %s366
        %s368 = smul.addr %s367, 8
        %s369 = scalar_lea.vmem %s3, %s368
        %p370 = scmp.lt.s32.totalorder %s33, 7
        %s371 = scalar_select %p370, %s33, 7
        %s372 = smul.addr %s371, 32
        %s373 = smul.addr %s372, 4
        %s374 = scalar_lea.vmem %s4, %s373
        %p375 = scmp.lt.s32.totalorder %s33, 7
        %s376 = scalar_select %p375, %s33, 7
        %s377 = smul.addr %s376, 16
        %s378 = smul.addr %s377, 4
        %s379 = scalar_lea.vmem %s5, %s378
        %p380 = scmp.lt.s32.totalorder %s32, 1
        %s381 = scalar_select %p380, %s32, 1
        %p382 = scmp.lt.s32.totalorder %s33, 7
        %s383 = scalar_select %p382, %s33, 7
        %s384 = smul.addr %s381, 8
        %s385 = sadd.s32 %s383, %s384
        %s386 = scalar_lea.vmem %s7, %s385
        %p388 = scmp.eq.s32.totalorder %s33, 0
        // Predicated region
        $region41: #{olmoe_importance_forward.3} parent=39 // pred_check
          %p389 = pneg %p388
        $region42: #{olmoe_importance_forward.3} parent=39 // pred_check_branch
          %391 = sbr.rel (%p389) target = $region44
        $region43: #{olmoe_importance_forward.3} parent=39 // pred_region
          %392 = vst [vmem:[%s340] sm:$0xff] 0.0
        $region44: #{olmoe_importance_forward.3} parent=39 // pred_fallthru
          _
        %393 = vst [vmem:[%s386] sm:$0x1] 0.0
        %s394 = sshra.s32 %s33, 7
        %s395 = sand.u32 %s33, 127
        %s396 = sadd.s32 %s394, %s32
        %s397 = smul.u32 %s396, 128
        %s398 = sshra.s32 %s33, 7
        %s399 = sand.u32 %s33, 127
        %s400 = sadd.s32 %s397, %s399
        %s401 = sld [smem:[#allocation3 + %s400]]
        %p402 = scmp.gt.s32.totalorder %s401, 0
        // Predicated region
        $region45: #{olmoe_importance_forward.3} parent=39 // pred_check
          %p403 = pneg %p402
        $region46: #{olmoe_importance_forward.3} parent=39 // pred_check_branch
          %405 = sbr.rel (%p403) target = $region48
        $region47: #{olmoe_importance_forward.3} parent=39 // pred_region
          %v406 = vld [vmem:[%s353] sm:$0xf]
          %v407 = vld [vmem:[%s374] sm:$0xff]
          %v408 = vld [vmem:[%s374 + $0x8] sm:$0xff]
          %v409 = vld [vmem:[%s374 + $0x10] sm:$0xff]
          %v410 = vld [vmem:[%s374 + $0x18] sm:$0xff]
          %v411 = vld [vmem:[%s374 + $0x20] sm:$0xff]
          %v412 = vld [vmem:[%s374 + $0x28] sm:$0xff]
          %v413 = vld [vmem:[%s374 + $0x30] sm:$0xff]
          %v414 = vld [vmem:[%s374 + $0x38] sm:$0xff]
          %v415 = vld [vmem:[%s374 + $0x40] sm:$0xff]
          %v416 = vld [vmem:[%s374 + $0x48] sm:$0xff]
          %v417 = vld [vmem:[%s374 + $0x50] sm:$0xff]
          %v418 = vld [vmem:[%s374 + $0x58] sm:$0xff]
          %v419 = vld [vmem:[%s374 + $0x60] sm:$0xff]
          %v420 = vld [vmem:[%s374 + $0x68] sm:$0xff]
          %v421 = vld [vmem:[%s374 + $0x70] sm:$0xff]
          %v422 = vld [vmem:[%s374 + $0x78] sm:$0xff]
          %v439 = vunpack.c.l.b16 %v407
          %v440 = vunpack.c.h.b16 %v407
          %v441 = vunpack.c.l.b16 %v408
          %v442 = vunpack.c.h.b16 %v408
          %v443 = vunpack.c.l.b16 %v409
          %v444 = vunpack.c.h.b16 %v409
          %v445 = vunpack.c.l.b16 %v410
          %v446 = vunpack.c.h.b16 %v410
          %v447 = vunpack.c.l.b16 %v411
          %v448 = vunpack.c.h.b16 %v411
          %v449 = vunpack.c.l.b16 %v412
          %v450 = vunpack.c.h.b16 %v412
          %v451 = vunpack.c.l.b16 %v413
          %v452 = vunpack.c.h.b16 %v413
          %v453 = vunpack.c.l.b16 %v414
          %v454 = vunpack.c.h.b16 %v414
          %v455 = vunpack.c.l.b16 %v415
          %v456 = vunpack.c.h.b16 %v415
          %v457 = vunpack.c.l.b16 %v416
          %v458 = vunpack.c.h.b16 %v416
          %v459 = vunpack.c.l.b16 %v417
          %v460 = vunpack.c.h.b16 %v417
          %v461 = vunpack.c.l.b16 %v418
          %v462 = vunpack.c.h.b16 %v418
          %v463 = vunpack.c.l.b16 %v419
          %v464 = vunpack.c.h.b16 %v419
          %v465 = vunpack.c.l.b16 %v420
          %v466 = vunpack.c.h.b16 %v420
          %v467 = vunpack.c.l.b16 %v421
          %v468 = vunpack.c.h.b16 %v421
          %v469 = vunpack.c.l.b16 %v422
          %v470 = vunpack.c.h.b16 %v422
          %v471 = vpack.c.b16 %v441, %v439
          %v472 = vpack.c.b16 %v442, %v440
          %v473 = vpack.c.b16 %v445, %v443
          %v474 = vpack.c.b16 %v446, %v444
          %v475 = vpack.c.b16 %v449, %v447
          %v476 = vpack.c.b16 %v450, %v448
          %v477 = vpack.c.b16 %v453, %v451
          %v478 = vpack.c.b16 %v454, %v452
          %v479 = vpack.c.b16 %v457, %v455
          %v480 = vpack.c.b16 %v458, %v456
          %v481 = vpack.c.b16 %v461, %v459
          %v482 = vpack.c.b16 %v462, %v460
          %v483 = vpack.c.b16 %v465, %v463
          %v484 = vpack.c.b16 %v466, %v464
          %v485 = vpack.c.b16 %v469, %v467
          %v486 = vpack.c.b16 %v470, %v468
          %503 = vmatprep.subr.bf16.mxu0 %v472
          %504 = vmatpush1.bf16.msra.mxu0 %v471
          %505 = vmatprep.subr.bf16.mxu0 %v474
          %506 = vmatpush1.bf16.msra.mxu0 %v473
          %507 = vmatprep.subr.bf16.mxu0 %v476
          %508 = vmatpush1.bf16.msra.mxu0 %v475
          %509 = vmatprep.subr.bf16.mxu0 %v478
          %510 = vmatpush1.bf16.msra.mxu0 %v477
          %511 = vmatprep.subr.bf16.mxu0 %v480
          %512 = vmatpush1.bf16.msra.mxu0 %v479
          %513 = vmatprep.subr.bf16.mxu0 %v482
          %514 = vmatpush1.bf16.msra.mxu0 %v481
          %515 = vmatprep.subr.bf16.mxu0 %v484
          %516 = vmatpush1.bf16.msra.mxu0 %v483
          %517 = vmatprep.subr.bf16.mxu0 %v486
          %518 = vmatpush1.bf16.msra.mxu0 %v485
          %519 = vmatprep.subr.bf16.mxu0 0
          %520 = vmatpush1.bf16.msra.mxu0 0
          %521 = vmatprep.subr.bf16.mxu0 0
          %522 = vmatpush1.bf16.msra.mxu0 0
          %523 = vmatprep.subr.bf16.mxu0 0
          %524 = vmatpush1.bf16.msra.mxu0 0
          %525 = vmatprep.subr.bf16.mxu0 0
          %526 = vmatpush1.bf16.msra.mxu0 0
          %527 = vmatprep.subr.bf16.mxu0 0
          %528 = vmatpush1.bf16.msra.mxu0 0
          %529 = vmatprep.subr.bf16.mxu0 0
          %530 = vmatpush1.bf16.msra.mxu0 0
          %531 = vmatprep.subr.bf16.mxu0 0
          %532 = vmatpush1.bf16.msra.mxu0 0
          %533 = vmatprep.subr.bf16.mxu0 0
          %534 = vmatpush1.bf16.msra.mxu0 0
          %535 = vmatprep.mubr.bf16.mxu0 0
          %536 = vmatmul.mubr.bf16.gmra.mrb[0].mxu0 %v406
          %v537 = vpop.f32.mrb[0].mxu0
          %v538 = vadd.f32 0.0, %v537
          %v539 = vpop.f32.mrb[0].mxu0
          %v540 = vadd.f32 0.0, %v539
          %v541 = vpop.f32.mrb[0].mxu0
          %v542 = vpop.f32.mrb[0].mxu0
          %543 = vdwg.mxu0
          %v544 = vxor.u32 %v538, 2147483648
          %v545 = vmul.f32 %v544, 1.442695
          %v546 = vpow.pop %v545
          %v547 = vadd.f32 %v546, 1.0
          %v548 = vrcp.pop %v547
          %v549 = vmul.f32 1.0, %v548
          %v550 = vmul.f32 %v538, %v549
          %v551 = vmul.f32 %v550, %v540
          %v552 = vpack.c.bf16 %v551, %v551
          %v553 = vld [vmem:[%s379] sm:$0xf]
          %v554 = vld [vmem:[%s379 + $0x4] sm:$0xf]
          %v555 = vld [vmem:[%s379 + $0x8] sm:$0xf]
          %v556 = vld [vmem:[%s379 + $0xc] sm:$0xf]
          %v557 = vld [vmem:[%s379 + $0x10] sm:$0xf]
          %v558 = vld [vmem:[%s379 + $0x14] sm:$0xf]
          %v559 = vld [vmem:[%s379 + $0x18] sm:$0xf]
          %v560 = vld [vmem:[%s379 + $0x1c] sm:$0xf]
          %v561 = vld [vmem:[%s379 + $0x20] sm:$0xf]
          %v562 = vld [vmem:[%s379 + $0x24] sm:$0xf]
          %v563 = vld [vmem:[%s379 + $0x28] sm:$0xf]
          %v564 = vld [vmem:[%s379 + $0x2c] sm:$0xf]
          %v565 = vld [vmem:[%s379 + $0x30] sm:$0xf]
          %v566 = vld [vmem:[%s379 + $0x34] sm:$0xf]
          %v567 = vld [vmem:[%s379 + $0x38] sm:$0xf]
          %v568 = vld [vmem:[%s379 + $0x3c] sm:$0xf]
          %v585 = vunpack.c.l.b16 %v553
          %v586 = vunpack.c.l.b16 %v554
          %v587 = vunpack.c.l.b16 %v555
          %v588 = vunpack.c.l.b16 %v556
          %v589 = vunpack.c.l.b16 %v557
          %v590 = vunpack.c.l.b16 %v558
          %v591 = vunpack.c.l.b16 %v559
          %v592 = vunpack.c.l.b16 %v560
          %v593 = vunpack.c.l.b16 %v561
          %v594 = vunpack.c.l.b16 %v562
          %v595 = vunpack.c.l.b16 %v563
          %v596 = vunpack.c.l.b16 %v564
          %v597 = vunpack.c.l.b16 %v565
          %v598 = vunpack.c.l.b16 %v566
          %v599 = vunpack.c.l.b16 %v567
          %v600 = vunpack.c.l.b16 %v568
          %v601 = vpack.c.b16 %v586, %v585
          %v602 = vpack.c.b16 %v588, %v587
          %v603 = vpack.c.b16 %v590, %v589
          %v604 = vpack.c.b16 %v592, %v591
          %v605 = vpack.c.b16 %v594, %v593
          %v606 = vpack.c.b16 %v596, %v595
          %v607 = vpack.c.b16 %v598, %v597
          %v608 = vpack.c.b16 %v600, %v599
          %617 = vmatprep.subr.bf16.mxu0 0
          %618 = vmatpush1.bf16.msra.mxu0 %v601
          %619 = vmatprep.subr.bf16.mxu0 0
          %620 = vmatpush1.bf16.msra.mxu0 %v602
          %621 = vmatprep.subr.bf16.mxu0 0
          %622 = vmatpush1.bf16.msra.mxu0 %v603
          %623 = vmatprep.subr.bf16.mxu0 0
          %624 = vmatpush1.bf16.msra.mxu0 %v604
          %625 = vmatprep.subr.bf16.mxu0 0
          %626 = vmatpush1.bf16.msra.mxu0 %v605
          %627 = vmatprep.subr.bf16.mxu0 0
          %628 = vmatpush1.bf16.msra.mxu0 %v606
          %629 = vmatprep.subr.bf16.mxu0 0
          %630 = vmatpush1.bf16.msra.mxu0 %v607
          %631 = vmatprep.subr.bf16.mxu0 0
          %632 = vmatpush1.bf16.msra.mxu0 %v608
          %633 = vmatprep.subr.bf16.mxu0 0
          %634 = vmatpush1.bf16.msra.mxu0 0
          %635 = vmatprep.subr.bf16.mxu0 0
          %636 = vmatpush1.bf16.msra.mxu0 0
          %637 = vmatprep.subr.bf16.mxu0 0
          %638 = vmatpush1.bf16.msra.mxu0 0
          %639 = vmatprep.subr.bf16.mxu0 0
          %640 = vmatpush1.bf16.msra.mxu0 0
          %641 = vmatprep.subr.bf16.mxu0 0
          %642 = vmatpush1.bf16.msra.mxu0 0
          %643 = vmatprep.subr.bf16.mxu0 0
          %644 = vmatpush1.bf16.msra.mxu0 0
          %645 = vmatprep.subr.bf16.mxu0 0
          %646 = vmatpush1.bf16.msra.mxu0 0
          %647 = vmatprep.subr.bf16.mxu0 0
          %648 = vmatpush1.bf16.msra.mxu0 0
          %649 = vmatprep.mubr.bf16.mxu0 0
          %650 = vmatmul.mubr.bf16.gmra.mrb[0].mxu0 %v552
          %v651 = vpop.f32.mrb[0].mxu0
          %v652 = vadd.f32 0.0, %v651
          %v653 = vpop.f32.mrb[0].mxu0
          %v654 = vpop.f32.mrb[0].mxu0
          %v655 = vpop.f32.mrb[0].mxu0
          %656 = vdwg.mxu0
          %v657 = vld [vmem:[%s340] sm:$0xff]
          %v658 = vld [vmem:[%s361] sm:$0xff]
          %660 = vset.pattern.permute.xlu0 0
          %661 = vperm.xlu0 %660, %v658
          %v662 = vpop.permute.xlu0 %661
          %v664 = vmul.f32 %v662, %v652
          %v665 = vadd.f32 %v657, %v664
          %666 = vst [vmem:[%s340] sm:$0xff] %v665
          %v667 = vmul.f32 %v652, %v652
          %668 = vadd.xlane.f32.xlu0 %v667
          %v669 = vpop.xlane.xlu0 %668
          %v670 = vrsqrt.pop %v669
          %v671 = vmul.f32 %v669, %v670
          %vm672 = vcmp.eq.f32.partialorder %v669, inf
          %v673 = vsel %vm672, %v669, %v671
          %vm674 = vcmp.eq.f32.partialorder %v669, 0.0
          %v675 = vand.u32 %v669, 2147483648
          %v676 = vsel %vm674, %v675, %v673
          %v677 = vld [vmem:[%s369] sm:$0xff]
          %v678 = vmul.f32 %v677, %v676
          %vm679 = vcmask 7168
          %v680 = vsel %vm679, %v678, 0.0
          %681 = vadd.xlane.f32.xlu0 %v680
          %v682 = vpop.xlane.xlu0 %681
          %v683 = vrot.slane %v682, 4
          %v684 = vadd.f32 %v682, %v683
          %v685 = vrot.slane %v684, 2
          %v686 = vadd.f32 %v684, %v685
          %v687 = vrot.slane %v686, 1
          %v688 = vadd.f32 %v686, %v687
          %s689 = vtos %v688
          %v690 = vstv %s689
          %691 = vst [vmem:[%s386] sm:$0x1] %v690
        $region48: #{olmoe_importance_forward.3} parent=39 // pred_fallthru
          _
        %s692 = sand.u32 %s182, 1
        %s693 = scalar_lea.sflag [#allocation5], %s692
        %s694 = sand.u32 %s182, 1
        %s695 = smul.addr %s694, 8
        %s696 = scalar_lea.vmem [#allocation4], %s695
        %p697 = scmp.lt.s32.totalorder %s32, 1
        %s698 = scalar_select %p697, %s32, 1
        %p699 = scmp.lt.s32.totalorder %s33, 7
        %s700 = scalar_select %p699, %s33, 7
        %s701 = smul.addr %s698, 8
        %s702 = sadd.s32 %s700, %s701
        %s703 = scalar_lea.vmem %s7, %s702
        // Predicated region
        $region49: #{olmoe_importance_forward.3} parent=39 // pred_check
          %p704 = pneg %p192
        $region50: #{olmoe_importance_forward.3} parent=39 // pred_check_branch
          %706 = sbr.rel (%p704) target = $region52
        $region51: #{olmoe_importance_forward.3} parent=39 // pred_region
          %s708 = ssub.s32 128, 128
          %709 = vsyncadd %s693, %s708
          %s710 = smul.addr %s32, 128
          %s711 = scalar_lea.hbm %s6, %s710
          %s713 = sshll.u32 %s696, 4
          %s714 = int_to_ptr.vmem [resolvable:$true] %s713
          %716 = dma.vmem_to_hbm [thread:$0]  %s714, 128, %s711, %s693
        $region52: #{olmoe_importance_forward.3} parent=39 // pred_fallthru
          _
        // Predicated region
        $region53: #{olmoe_importance_forward.3} parent=39 // pred_check
          %p717 = pneg %p220
        $region54: #{olmoe_importance_forward.3} parent=39 // pred_check_branch
          %719 = sbr.rel (%p717) target = $region56
        $region55: #{olmoe_importance_forward.3} parent=39 // pred_region
          _
        $region56: #{olmoe_importance_forward.3} parent=39 // pred_fallthru
          _
      $region40: #{olmoe_importance_forward.3} parent=5 // pred_fallthru
        _
      %p720 = scmp.le.s32.totalorder 2, %s23
      // Predicated region
      $region57: #{olmoe_importance_forward.3} parent=5 // pred_check
        %p721 = pneg %p720
      $region58: #{olmoe_importance_forward.3} parent=5 // pred_check_branch
        %723 = sbr.rel (%p721) target = $region60
      $region59: #{olmoe_importance_forward.3} parent=5 // pred_region
        %s724 = ssub.s32 %s23, 2
        // Predicated region
        $region61: #{olmoe_importance_forward.3} parent=59 // pred_check
          %p725 = pneg %p198
        $region62: #{olmoe_importance_forward.3} parent=59 // pred_check_branch
          %727 = sbr.rel (%p725) target = $region64
        $region63: #{olmoe_importance_forward.3} parent=59 // pred_region
          %s728 = sand.u32 %s183, 1
          %s729 = scalar_lea.sflag [#allocation5], %s728
          %s730 = sand.u32 %s183, 1
          %s731 = smul.addr %s730, 8
          %s732 = scalar_lea.vmem [#allocation4], %s731
          %733 = dma.done %s729, 128
        $region64: #{olmoe_importance_forward.3} parent=59 // pred_fallthru
          _
        // Predicated region
        $region65: #{olmoe_importance_forward.3} parent=59 // pred_check
          %p734 = pneg %p226
        $region66: #{olmoe_importance_forward.3} parent=59 // pred_check_branch
          %736 = sbr.rel (%p734) target = $region68
        $region67: #{olmoe_importance_forward.3} parent=59 // pred_region
          %p737 = scmp.lt.s32.totalorder %s34, 1
          %s738 = scalar_select %p737, %s34, 1
          %p739 = scmp.lt.s32.totalorder %s35, 7
          %s740 = scalar_select %p739, %s35, 7
          %s741 = smul.addr %s738, 8
          %s742 = sadd.s32 %s740, %s741
          %s743 = scalar_lea.vmem %s7, %s742
        $region68: #{olmoe_importance_forward.3} parent=59 // pred_fallthru
          _
      $region60: #{olmoe_importance_forward.3} parent=5 // pred_fallthru
        _
    $region6: #{olmoe_importance_forward.3} parent=1 // loop_footer
      %s27 = sadd.s32 1, %s23
    $region7: #{olmoe_importance_forward.3} parent=1 // loop_footer_branch
      %22 = sbr.rel target = $region3
    $region8: #{olmoe_importance_forward.3} parent=1 // loop_exit
      _
    %744 = vsyncpa [#allocation5], 1
    %s745 = scalar_lea.sflag [#allocation5], 1
    %746 = vsyncpa %s745, 1

</llo_original>
